<compile_context>
chip_gen: v5e
topology: v5e:2x2
jax: 0.10.0
libtpu: 0.0.40
codegen_flags: <defaults>
</compile_context>

<pallas_src>
import functools

import jax
import jax.numpy as jnp
from jax import lax
from jax.experimental import pallas as pl
from jax.experimental.pallas import tpu as pltpu

_NUM_CORE_SPLITS = 2            # 2-way row split -> both TCs on v7x, no-op cost on 1-TC chips
_OUT_SUBLANES = 8
_OUT_LANES = 128                # lane-dense output block (unmasked vst)


def _vmem_budgets():
    """Returns (per-logits-buffer budget, vmem_limit_bytes) for this chip."""
    cap = None
    try:
        cap = getattr(pltpu.get_tpu_info(), "vmem_capacity_bytes", None)
    except Exception:
        cap = None
    if cap is not None and cap >= 100 * 1024 * 1024:        # v5e / v6e: 128 MiB VMEM
        return 16 * 1024 * 1024, 56 * 1024 * 1024
    # v7x (64 MiB / TC) or unknown: stay conservative.
    return 12 * 1024 * 1024, 40 * 1024 * 1024


def _choose_row_tile(rows_per_core, vocab, itemsize, buf_budget):
    # sublane alignment: 8 for 4B dtypes, 16 for 2B (bf16 packing), 32 for 1B.
    align = 8 if itemsize >= 4 else (16 if itemsize == 2 else 32)
    rt = buf_budget // max(1, vocab * itemsize)
    rt = max(align, min(rt, 2048))
    rt = min(rt, max(align, rows_per_core))   # don't over-pad tiny problems
    rt = max(align, (rt // align) * align)
    return int(rt)


def _lm_criterion_kernel(n_ref, logits_ref, target_ref, mask_ref, colid_ref,
                         out_ref, acc_ref, *, n_valid_rows):
    step = pl.program_id(1)

    @pl.when(step == 0)
    def _init():
        acc_ref[...] = jnp.zeros_like(acc_ref)

    logits = logits_ref[...]                  # (RT, V) NATIVE dtype (no full-tile upcast)
    tgt = target_ref[...]                     # (RT, 1) int32 (-1 sentinel on padded rows)
    msk = mask_ref[...]                       # (RT, 1) f32
    col_ids = colid_ref[...]                  # (1, V) int32, constant block -> resident

    # Gather logits[row, target[row]]: select in the logits' native dtype;
    # exactly one element per row survives, so the native-dtype sum is exact.
    sel = jnp.where(col_ids == tgt, logits, jnp.zeros((), logits.dtype))
    picked = jnp.sum(sel, axis=1, keepdims=True).astype(jnp.float32)   # (RT, 1) f32

    # Ragged-tail guard: rows >= n_valid_rows may read unspecified VMEM
    # (logits is NOT padded in HBM), so zero them explicitly (0*NaN hazard).
    rt = logits.shape[0]
    row0 = (pl.program_id(0) * pl.num_programs(1) + step) * rt
    rows = row0 + lax.broadcasted_iota(jnp.int32, (rt, 1), 0)
    picked = jnp.where(rows < n_valid_rows, picked, jnp.float32(0.0))

    # Per-sublane partial sums; no cross-sublane reduce / scalar RMW per step.
    acc_ref[...] += picked * msk

    @pl.when(step == pl.num_programs(1) - 1)
    def _finalize():
        partial = jnp.sum(acc_ref[...])                      # one XLU reduce per core
        val = (-partial) / jnp.float32(n_ref[0])             # fold negate + /N here
        out_ref[...] = jnp.broadcast_to(val, out_ref.shape).astype(out_ref.dtype)


def language_model_criterion(logits, target, mask):
    """logits: (N, S, V) log-probs; target: (N, >=S) int; mask: (N, >=S)."""
    N, S, V = logits.shape
    target = target[:, :S].reshape(-1, 1).astype(jnp.int32)    # (N*S, 1)
    mask = mask[:, :S].reshape(-1, 1).astype(jnp.float32)      # (N*S, 1)
    logits2 = logits.reshape(-1, V)                            # (N*S, V), native dtype, NO pad

    B = N * S
    itemsize = jnp.dtype(logits2.dtype).itemsize
    buf_budget, vmem_limit = _vmem_budgets()
    rows_per_core = -(-B // _NUM_CORE_SPLITS)
    rt = _choose_row_tile(rows_per_core, V, itemsize, buf_budget)

    chunk = _NUM_CORE_SPLITS * rt
    B_pad = ((B + chunk - 1) // chunk) * chunk
    pad = B_pad - B
    if pad:
        # Only the tiny int32/f32 columns are padded.  target = -1 matches no
        # class column; mask = 0 kills any contribution.  Logits stay unpadded.
        target = jnp.pad(target, ((0, pad), (0, 0)), constant_values=-1)
        mask = jnp.pad(mask, ((0, pad), (0, 0)))

    steps_per_core = B_pad // chunk
    n_logit_blocks = -(-B // rt)               # valid logits block count
    kernel = functools.partial(_lm_criterion_kernel, n_valid_rows=B)

    # Column-id row, passed once; constant block index -> kept resident in VMEM.
    col_ids = lax.broadcasted_iota(jnp.int32, (1, V), 1)
    n_arr = jnp.array([N], dtype=jnp.int32)    # scalar-prefetch operand (SMEM)

    def row_map(c, i, n):                      # target / mask (padded, always in range)
        return (c * steps_per_core + i, 0)

    def logits_row_map(c, i, n):               # clamp fully-OOB tail blocks in range
        blk = c * steps_per_core + i
        return (jnp.minimum(blk, n_logit_blocks - 1), 0)

    # TODO(synk): for very large V (>~8-16K) where logits feed only this loss,
    # a strip-gather variant (scalar-prefetch targets, fetch only the 128-lane
    # strip holding target[row]) would cut HBM bytes ~V/128; needs a roofline
    # break-even check vs per-row DMA descriptor cost before committing.
    out = pl.pallas_call(
        kernel,
        out_shape=jax.ShapeDtypeStruct(
            (_NUM_CORE_SPLITS * _OUT_SUBLANES, _OUT_LANES), jnp.float32),
        grid_spec=pltpu.PrefetchScalarGridSpec(
            num_scalar_prefetch=1,
            grid=(_NUM_CORE_SPLITS, steps_per_core),
            in_specs=[
                pl.BlockSpec((rt, V), logits_row_map),
                pl.BlockSpec((rt, 1), row_map),
                pl.BlockSpec((rt, 1), row_map),
                pl.BlockSpec((1, V), lambda c, i, n: (0, 0)),
            ],
            out_specs=pl.BlockSpec((_OUT_SUBLANES, _OUT_LANES), lambda c, i, n: (c, 0)),
            scratch_shapes=[pltpu.VMEM((rt, 1), jnp.float32)],
        ),
        compiler_params=pltpu.CompilerParams(
            dimension_semantics=("parallel", "arbitrary"),
            vmem_limit_bytes=vmem_limit),
    )(n_arr, logits2, target, mask, col_ids)

    # Each core's (8,128) block holds its already-negated & scaled partial.
    return jnp.sum(out[0::_OUT_SUBLANES, 0])


if __name__ == "__main__":
    key = jax.random.PRNGKey(0)
    N, S, V = 2, 9, 32   # S=9 exercises the ragged-tail path; target/mask longer than S

    k1, k2, k3 = jax.random.split(key, 3)
    raw = jax.random.normal(k1, (N, S, V), dtype=jnp.float32)
    logits = jax.nn.log_softmax(raw, axis=-1)                  # log-probs for NLLLoss
    target = jax.random.randint(k2, (N, S + 2), 0, V, dtype=jnp.int32)
    mask = (jax.random.uniform(k3, (N, S + 2)) > 0.3).astype(jnp.float32)

    out = language_model_criterion(logits, target, mask)
    out = jax.block_until_ready(out)

    # Pure-JAX reference check.
    flat_logits = logits.reshape(-1, V)
    flat_t = target[:, :S].reshape(-1)
    flat_m = mask[:, :S].reshape(-1)
    ref = jnp.sum(-flat_logits[jnp.arange(N * S), flat_t] * flat_m) / N
    assert jnp.allclose(out, ref, rtol=1e-5, atol=1e-6), (out, ref)

    print("KERNEL_OK")
</pallas_src>

<mosaic_0001>
module attributes {stable_mosaic.version = 11 : i64} {
  func.func @_lm_criterion_kernel(%arg0: i32, %arg1: i32, %arg2: memref<1xi32, #tpu.memory_space<smem>>, %arg3: memref<8x32xf32, #tpu.memory_space<vmem>>, %arg4: memref<8x1xi32, #tpu.memory_space<vmem>>, %arg5: memref<8x1xf32, #tpu.memory_space<vmem>>, %arg6: memref<1x32xi32, #tpu.memory_space<vmem>>, %arg7: memref<8x128xf32, #tpu.memory_space<vmem>>, %arg8: memref<8x1xf32, #tpu.memory_space<vmem>>) attributes {dimension_semantics = [#tpu.dimension_semantics<parallel>, #tpu.dimension_semantics<arbitrary>], iteration_bounds = array<i64: 2, 2>, scalar_prefetch = 1 : i64, scratch_operands = 1 : i64, tpu.core_type = #tpu.core_type<tc>, window_params = [{transform_indices = @transform_0, window_bounds = array<i64: 8, 32>}, {transform_indices = @transform_1, window_bounds = array<i64: 8, 1>}, {transform_indices = @transform_2, window_bounds = array<i64: 8, 1>}, {pipeline_mode = #tpu.pipeline_mode<synchronous>, transform_indices = @transform_3, window_bounds = array<i64: 1, 32>}, {transform_indices = @transform_4, window_bounds = array<i64: 8, 128>}]} {
    %c0_i32 = arith.constant 0 : i32
    %0 = arith.cmpi eq, %arg1, %c0_i32 : i32
    %1 = arith.extui %0 : i1 to i32
    %c0_i32_0 = arith.constant 0 : i32
    %2 = arith.cmpi ne, %1, %c0_i32_0 : i32
    scf.if %2 {
      %cst_15 = arith.constant 0.000000e+00 : f32
      %31 = vector.broadcast %cst_15 : f32 to vector<8x1xf32>
      %c0_16 = arith.constant 0 : index
      %c0_17 = arith.constant 0 : index
      %32 = vector.load %arg8[%c0_16, %c0_17] : memref<8x1xf32, #tpu.memory_space<vmem>>, vector<8x1xf32>
      tpu.vector_store %arg8[%c0_16, %c0_17], %31 {strides = array<i32>} : memref<8x1xf32, #tpu.memory_space<vmem>>, vector<8x1xf32>,
    } else {
    }
    %c0 = arith.constant 0 : index
    %c0_1 = arith.constant 0 : index
    %3 = vector.load %arg3[%c0, %c0_1] : memref<8x32xf32, #tpu.memory_space<vmem>>, vector<8x32xf32>
    %c0_2 = arith.constant 0 : index
    %c0_3 = arith.constant 0 : index
    %4 = vector.load %arg4[%c0_2, %c0_3] : memref<8x1xi32, #tpu.memory_space<vmem>>, vector<8x1xi32>
    %c0_4 = arith.constant 0 : index
    %c0_5 = arith.constant 0 : index
    %5 = vector.load %arg5[%c0_4, %c0_5] : memref<8x1xf32, #tpu.memory_space<vmem>>, vector<8x1xf32>
    %c0_6 = arith.constant 0 : index
    %c0_7 = arith.constant 0 : index
    %6 = vector.load %arg6[%c0_6, %c0_7] : memref<1x32xi32, #tpu.memory_space<vmem>>, vector<1x32xi32>
    %7 = vector.broadcast %6 : vector<1x32xi32> to vector<8x32xi32>
    %8 = vector.broadcast %4 : vector<8x1xi32> to vector<8x32xi32>
    %9 = arith.cmpi eq, %7, %8 : vector<8x32xi32>
    %cst = arith.constant 0.000000e+00 : f32
    %10 = vector.broadcast %cst : f32 to vector<8x32xf32>
    %11 = arith.select %9, %3, %10 : vector<8x32xi1>, vector<8x32xf32>
    %cst_8 = arith.constant dense<0.000000e+00> : vector<8xf32>
    %12 = vector.multi_reduction <add>, %11, %cst_8 [1] : vector<8x32xf32> to vector<8xf32>
    %13 = vector.shape_cast %12 : vector<8xf32> to vector<8x1xf32>
    %c2_i32 = arith.constant 2 : i32
    %14 = arith.muli %arg0, %c2_i32 : i32
    %15 = arith.addi %14, %arg1 : i32
    %c8_i32 = arith.constant 8 : i32
    %16 = arith.muli %15, %c8_i32 : i32
    %17 = tpu.iota {dimensions = array<i32: 0>} : vector<8x1xi32>
    %18 = vector.broadcast %16 : i32 to vector<8x1xi32>
    %19 = arith.addi %18, %17 : vector<8x1xi32>
    %c18_i32 = arith.constant 18 : i32
    %20 = vector.broadcast %c18_i32 : i32 to vector<8x1xi32>
    %21 = arith.cmpi slt, %19, %20 : vector<8x1xi32>
    %cst_9 = arith.constant 0.000000e+00 : f32
    %22 = vector.broadcast %cst_9 : f32 to vector<8x1xf32>
    %23 = arith.select %21, %13, %22 : vector<8x1xi1>, vector<8x1xf32>
    %c0_10 = arith.constant 0 : index
    %c0_11 = arith.constant 0 : index
    %24 = vector.load %arg8[%c0_10, %c0_11] : memref<8x1xf32, #tpu.memory_space<vmem>>, vector<8x1xf32>
    %25 = arith.mulf %23, %5 : vector<8x1xf32>
    %26 = arith.addf %24, %25 : vector<8x1xf32>
    %c0_12 = arith.constant 0 : index
    %c0_13 = arith.constant 0 : index
    %27 = vector.load %arg8[%c0_12, %c0_13] : memref<8x1xf32, #tpu.memory_space<vmem>>, vector<8x1xf32>
    tpu.vector_store %arg8[%c0_12, %c0_13], %26 {strides = array<i32>} : memref<8x1xf32, #tpu.memory_space<vmem>>, vector<8x1xf32>,
    %c1_i32 = arith.constant 1 : i32
    %28 = arith.cmpi eq, %arg1, %c1_i32 : i32
    %29 = arith.extui %28 : i1 to i32
    %c0_i32_14 = arith.constant 0 : i32
    %30 = arith.cmpi ne, %29, %c0_i32_14 : i32
    scf.if %30 {
      %c0_15 = arith.constant 0 : index
      %c0_16 = arith.constant 0 : index
      %31 = vector.load %arg8[%c0_15, %c0_16] : memref<8x1xf32, #tpu.memory_space<vmem>>, vector<8x1xf32>
      %32 = vector.shape_cast %31 : vector<8x1xf32> to vector<1x8x1xf32>
      %cst_17 = arith.constant dense<0.000000e+00> : vector<1xf32>
      %33 = vector.multi_reduction <add>, %32, %cst_17 [1, 2] : vector<1x8x1xf32> to vector<1xf32>
      %34 = vector.shape_cast %33 : vector<1xf32> to vector<1x1x1xf32>
      %35 = vector.extract %34[0, 0, 0] : f32 from vector<1x1x1xf32>
      %cst_18 = arith.constant 0.000000e+00 : f32
      %36 = arith.subf %cst_18, %35 : f32
      %c0_19 = arith.constant 0 : index
      %37 = memref.load %arg2[%c0_19] : memref<1xi32, #tpu.memory_space<smem>>
      %38 = arith.sitofp %37 : i32 to f32
      %39 = arith.divf %36, %38 : f32
      %40 = vector.broadcast %39 : f32 to vector<8x128xf32>
      %c0_20 = arith.constant 0 : index
      %c0_21 = arith.constant 0 : index
      %41 = vector.load %arg7[%c0_20, %c0_21] : memref<8x128xf32, #tpu.memory_space<vmem>>, vector<8x128xf32>
      tpu.vector_store %arg7[%c0_20, %c0_21], %40 {strides = array<i32>} : memref<8x128xf32, #tpu.memory_space<vmem>>, vector<8x128xf32>,
    } else {
    }
    return
  }
  func.func @transform_0(%arg0: i32, %arg1: i32, %arg2: memref<1xi32, #tpu.memory_space<smem>>) -> (i32, i32) {
    %c2_i32 = arith.constant 2 : i32
    %0 = arith.muli %arg0, %c2_i32 : i32
    %1 = arith.addi %0, %arg1 : i32
    %c2_i32_0 = arith.constant 2 : i32
    %2 = arith.minsi %1, %c2_i32_0 : i32
    %c0_i32 = arith.constant 0 : i32
    %c0_i32_1 = arith.constant 0 : i32
    return %2, %c0_i32 : i32, i32
  }
  func.func @transform_1(%arg0: i32, %arg1: i32, %arg2: memref<1xi32, #tpu.memory_space<smem>>) -> (i32, i32) {
    %c2_i32 = arith.constant 2 : i32
    %0 = arith.muli %arg0, %c2_i32 : i32
    %1 = arith.addi %0, %arg1 : i32
    %c0_i32 = arith.constant 0 : i32
    %c0_i32_0 = arith.constant 0 : i32
    return %1, %c0_i32 : i32, i32
  }
  func.func @transform_2(%arg0: i32, %arg1: i32, %arg2: memref<1xi32, #tpu.memory_space<smem>>) -> (i32, i32) {
    %c2_i32 = arith.constant 2 : i32
    %0 = arith.muli %arg0, %c2_i32 : i32
    %1 = arith.addi %0, %arg1 : i32
    %c0_i32 = arith.constant 0 : i32
    %c0_i32_0 = arith.constant 0 : i32
    return %1, %c0_i32 : i32, i32
  }
  func.func @transform_3(%arg0: i32, %arg1: i32, %arg2: memref<1xi32, #tpu.memory_space<smem>>) -> (i32, i32) {
    %c0_i32 = arith.constant 0 : i32
    %c0_i32_0 = arith.constant 0 : i32
    %c0_i32_1 = arith.constant 0 : i32
    return %c0_i32, %c0_i32_0 : i32, i32
  }
  func.func @transform_4(%arg0: i32, %arg1: i32, %arg2: memref<1xi32, #tpu.memory_space<smem>>) -> (i32, i32) {
    %c0_i32 = arith.constant 0 : i32
    %c0_i32_0 = arith.constant 0 : i32
    return %arg0, %c0_i32 : i32, i32
  }
}

</mosaic_0001>

<llo_original>
// kernel: tpu_custom_call.1
$region0: #{tpu_custom_call.1}
  #allocation0 [shape = 'u32[]', space=smem, size = 0x4, offset = 0x4, fixed_abs, tag = 'smem constant byte address 0x4 - core index']
  #allocation1 [shape = 'u32[72,128]{1,0:T(1,128)}', space=vmem, size = 0x9000, scoped, tag = 'internal scratch']
  #allocation2 [shape = 'f32[8,1]{1,0:T(8,128)}', space=vmem, size = 0x1000, scoped, tag = 'scratch operand']
  #allocation3 [shape = 's32[1]{0}', space=sflag, size = 0x4, scoped, tag = 'scoped memory for tpu_custom_call.1']
  #allocation4 [shape = 's32[1]{0:T(128)S(6)}', space=smem, size = 0x200, scoped, tag = 'prefetched SMEM operand 0']
  %s0 = inlined_call_operand.<no memory space> [shape: s32[1], index: 0, kind: input, shape index: {}]
  %s1 = inlined_call_operand.vmem [shape: f32[18,32], index: 1, kind: input, shape index: {}]
  %s2 = inlined_call_operand.vmem [shape: s32[32,1], index: 2, kind: input, shape index: {}]
  %s3 = inlined_call_operand.vmem [shape: f32[32,1], index: 3, kind: input, shape index: {}]
  %s4 = inlined_call_operand.vmem [shape: s32[1,32], index: 4, kind: input, shape index: {}]
  %s5 = inlined_call_operand.hbm [shape: f32[16,128], index: 5, kind: output, shape index: {}]
  %s6 = sld [smem:[#allocation0]]
  $region57: #{tpu_custom_call.1} parent=0
    _
  %s8 = ssub.s32 1, %s6
  %s9 = scalar_select 0, %s8, %s6
  %10 = sst [smem:[#allocation4]] %s0
  $region1: #{tpu_custom_call.1} parent=0
    #allocation5 [shape = 'u8[8192]{0}', space=vmem, size = 0x2000, scoped, tag = 'output window, operand 0']
    #allocation6 [shape = 's32[2]{0}', space=sflag, size = 0x8, scoped, tag = 'scoped memory for tpu_custom_call.1']
    %11 = vsyncpa [#allocation6], 0
    %s12 = scalar_lea.sflag [#allocation6], 1
    %13 = vsyncpa %s12, 0
    loop: start=0, step=1, limit=6
    $region2: #{tpu_custom_call.1} parent=1 // loop_pre_header
      _
    $region3: #{tpu_custom_call.1} parent=1 // loop_header
      %s15 = sphi 0, %s19
      %p16 = scmp.ge.s32.totalorder %s15, 6
      %s22 = sphi 0, %s34
      %s23 = sphi 0, %s30
      %s24 = sphi 0, %s22
      %s25 = sphi 0, %s23
      %s26 = sphi 0, %s24
      %s27 = sphi 0, %s25
      %s45 = sphi 0, %s47
      %s48 = sphi 0, %s45
      %s49 = sphi 0, %s48
      %s65 = sphi 0, %s49
      %s75 = sphi 0, %s77
      %s78 = sphi 0, %s75
      %s79 = sphi 0, %s78
      %s95 = sphi 0, %s79
      %s105 = sphi 0, %s107
      %s108 = sphi 0, %s105
      %s109 = sphi 0, %s108
      %s125 = sphi 0, %s109
      %s129 = sphi 0, %s129
      %s131 = sphi 0, %s129
      %s132 = sphi 0, %s131
      %s146 = sphi 0, %s132
      %s152 = sphi 0, %s154
      %s155 = sphi 0, %s152
      %s156 = sphi 0, %s155
      %s172 = sphi 0, %s156
    $region4: #{tpu_custom_call.1} parent=1 // loop_header_branch
      %18 = sbr.rel (%p16) target = $region8
    $region5: #{tpu_custom_call.1} parent=1 // loop_body
      %s20 = ssub.s32 %s15, 1
      %s21 = ssub.s32 %s15, 2
      %s28 = sadd.s32 1, %s23
      %p29 = scmp.ge.s32.totalorder %s28, 2
      %s30 = scalar_select %p29, 0, %s28
      %s31 = sadd.s32 1, %s22
      %s32 = scalar_select %p29, %s31, %s22
      %p33 = scmp.ge.s32.totalorder %s32, 2
      %s34 = scalar_select %p33, 0, %s32
      %s35 = smul.u32 %s22, 2
      %s36 = sadd.s32 %s35, %s23
      %p37 = scmp.lt.s32.totalorder %s36, 2
      %s38 = scalar_select %p37, %s36, 2
      %s39 = smul.u32 %s34, 2
      %s40 = sadd.s32 %s39, %s30
      %p41 = scmp.lt.s32.totalorder %s40, 2
      %s42 = scalar_select %p41, %s40, 2
      %s43 = ssub.s32 %s38, %s42
      %p44 = scmp.eq.s32.totalorder %s43, 0
      %s46 = sadd.s32 %s45, 1
      %s47 = scalar_select %p44, %s45, %s46
      %p50 = pneg %p44
      %p51 = scmp.eq.s32.totalorder %s15, 3
      %p52 = por %p50, %p51
      %p53 = scmp.ne.s32.totalorder %s45, %s48
      %p54 = scmp.eq.s32.totalorder %s15, 0
      %p55 = por %p53, %p54
      %p56 = scmp.ne.s32.totalorder %s45, %s48
      %p57 = scmp.eq.s32.totalorder %s20, 3
      %p58 = por %p56, %p57
      %p59 = scmp.ne.s32.totalorder %s48, %s49
      %p60 = scmp.eq.s32.totalorder %s20, 0
      %p61 = por %p59, %p60
      %p62 = scmp.ne.s32.totalorder %s48, %s49
      %p63 = scmp.eq.s32.totalorder %s21, 3
      %p64 = por %p62, %p63
      %p66 = scmp.ne.s32.totalorder %s49, %s65
      %p67 = scmp.eq.s32.totalorder %s21, 0
      %p68 = por %p66, %p67
      %s69 = smul.u32 %s22, 2
      %s70 = sadd.s32 %s69, %s23
      %s71 = smul.u32 %s34, 2
      %s72 = sadd.s32 %s71, %s30
      %s73 = ssub.s32 %s70, %s72
      %p74 = scmp.eq.s32.totalorder %s73, 0
      %s76 = sadd.s32 %s75, 1
      %s77 = scalar_select %p74, %s75, %s76
      %p80 = pneg %p74
      %p81 = scmp.eq.s32.totalorder %s15, 3
      %p82 = por %p80, %p81
      %p83 = scmp.ne.s32.totalorder %s75, %s78
      %p84 = scmp.eq.s32.totalorder %s15, 0
      %p85 = por %p83, %p84
      %p86 = scmp.ne.s32.totalorder %s75, %s78
      %p87 = scmp.eq.s32.totalorder %s20, 3
      %p88 = por %p86, %p87
      %p89 = scmp.ne.s32.totalorder %s78, %s79
      %p90 = scmp.eq.s32.totalorder %s20, 0
      %p91 = por %p89, %p90
      %p92 = scmp.ne.s32.totalorder %s78, %s79
      %p93 = scmp.eq.s32.totalorder %s21, 3
      %p94 = por %p92, %p93
      %p96 = scmp.ne.s32.totalorder %s79, %s95
      %p97 = scmp.eq.s32.totalorder %s21, 0
      %p98 = por %p96, %p97
      %s99 = smul.u32 %s22, 2
      %s100 = sadd.s32 %s99, %s23
      %s101 = smul.u32 %s34, 2
      %s102 = sadd.s32 %s101, %s30
      %s103 = ssub.s32 %s100, %s102
      %p104 = scmp.eq.s32.totalorder %s103, 0
      %s106 = sadd.s32 %s105, 1
      %s107 = scalar_select %p104, %s105, %s106
      %p110 = pneg %p104
      %p111 = scmp.eq.s32.totalorder %s15, 3
      %p112 = por %p110, %p111
      %p113 = scmp.ne.s32.totalorder %s105, %s108
      %p114 = scmp.eq.s32.totalorder %s15, 0
      %p115 = por %p113, %p114
      %p116 = scmp.ne.s32.totalorder %s105, %s108
      %p117 = scmp.eq.s32.totalorder %s20, 3
      %p118 = por %p116, %p117
      %p119 = scmp.ne.s32.totalorder %s108, %s109
      %p120 = scmp.eq.s32.totalorder %s20, 0
      %p121 = por %p119, %p120
      %p122 = scmp.ne.s32.totalorder %s108, %s109
      %p123 = scmp.eq.s32.totalorder %s21, 3
      %p124 = por %p122, %p123
      %p126 = scmp.ne.s32.totalorder %s109, %s125
      %p127 = scmp.eq.s32.totalorder %s21, 0
      %p128 = por %p126, %p127
      %s130 = sadd.s32 %s129, 1
      %p133 = scmp.eq.s32.totalorder %s15, 3
      %p134 = scmp.ne.s32.totalorder %s129, %s131
      %p135 = scmp.eq.s32.totalorder %s15, 0
      %p136 = por %p134, %p135
      %p137 = scmp.ne.s32.totalorder %s129, %s131
      %p138 = scmp.eq.s32.totalorder %s20, 3
      %p139 = por %p137, %p138
      %p140 = scmp.ne.s32.totalorder %s131, %s132
      %p141 = scmp.eq.s32.totalorder %s20, 0
      %p142 = por %p140, %p141
      %p143 = scmp.ne.s32.totalorder %s131, %s132
      %p144 = scmp.eq.s32.totalorder %s21, 3
      %p145 = por %p143, %p144
      %p147 = scmp.ne.s32.totalorder %s132, %s146
      %p148 = scmp.eq.s32.totalorder %s21, 0
      %p149 = por %p147, %p148
      %s150 = ssub.s32 %s22, %s34
      %p151 = scmp.eq.s32.totalorder %s150, 0
      %s153 = sadd.s32 %s152, 1
      %s154 = scalar_select %p151, %s152, %s153
      %p157 = pneg %p151
      %p158 = scmp.eq.s32.totalorder %s15, 3
      %p159 = por %p157, %p158
      %p160 = scmp.ne.s32.totalorder %s152, %s155
      %p161 = scmp.eq.s32.totalorder %s15, 0
      %p162 = por %p160, %p161
      %p163 = scmp.ne.s32.totalorder %s152, %s155
      %p164 = scmp.eq.s32.totalorder %s20, 3
      %p165 = por %p163, %p164
      %p166 = scmp.ne.s32.totalorder %s155, %s156
      %p167 = scmp.eq.s32.totalorder %s20, 0
      %p168 = por %p166, %p167
      %p169 = scmp.ne.s32.totalorder %s155, %s156
      %p170 = scmp.eq.s32.totalorder %s21, 3
      %p171 = por %p169, %p170
      %p173 = scmp.ne.s32.totalorder %s156, %s172
      %p174 = scmp.eq.s32.totalorder %s21, 0
      %p175 = por %p173, %p174
      %p176 = scmp.le.s32.totalorder 1, %s15
      %p177 = scmp.lt.s32.totalorder %s15, 5
      %p178 = pnand %p176, %p177
      %p179 = pneg %p178
      // Predicated region
      $region9: #{tpu_custom_call.1} parent=5 // pred_check
        _
      $region10: #{tpu_custom_call.1} parent=5 // pred_check_branch
        %181 = sbr.rel (%p178) target = $region12
      $region11: #{tpu_custom_call.1} parent=5 // pred_region
        %s182 = ssub.s32 %s15, 1
        // Predicated region
        $region13: #{tpu_custom_call.1} parent=11 // pred_check
          %p183 = pneg %p142
        $region14: #{tpu_custom_call.1} parent=11 // pred_check_branch
          %185 = sbr.rel (%p183) target = $region16
        $region15: #{tpu_custom_call.1} parent=11 // pred_region
          _
        $region16: #{tpu_custom_call.1} parent=11 // pred_fallthru
          _
      $region12: #{tpu_custom_call.1} parent=5 // pred_fallthru
        _
      %p186 = scmp.lt.s32.totalorder %s15, 4
      // Predicated region
      $region17: #{tpu_custom_call.1} parent=5 // pred_check
        %p187 = pneg %p186
      $region18: #{tpu_custom_call.1} parent=5 // pred_check_branch
        %189 = sbr.rel (%p187) target = $region20
      $region19: #{tpu_custom_call.1} parent=5 // pred_region
        // Predicated region
        $region21: #{tpu_custom_call.1} parent=19 // pred_check
          %p190 = pneg %p55
        $region22: #{tpu_custom_call.1} parent=19 // pred_check_branch
          %192 = sbr.rel (%p190) target = $region24
        $region23: #{tpu_custom_call.1} parent=19 // pred_region
          %s193 = smul.u32 %s22, 2
          %s194 = sadd.s32 %s193, %s23
          %p195 = scmp.lt.s32.totalorder %s194, 2
          %s196 = scalar_select %p195, %s194, 2
          %p197 = scmp.lt.s32.totalorder %s196, 2
          %s198 = scalar_select %p197, %s196, 2
          %s199 = smul.addr %s198, 8
          %s200 = scalar_lea.vmem %s1, %s199
          %s201 = smul.u32 %s22, 2
          %s202 = sadd.s32 %s201, %s23
          %p203 = scmp.lt.s32.totalorder %s202, 2
          %s204 = scalar_select %p203, %s202, 2
        $region24: #{tpu_custom_call.1} parent=19 // pred_fallthru
          _
        // Predicated region
        $region25: #{tpu_custom_call.1} parent=19 // pred_check
          %p205 = pneg %p85
        $region26: #{tpu_custom_call.1} parent=19 // pred_check_branch
          %207 = sbr.rel (%p205) target = $region28
        $region27: #{tpu_custom_call.1} parent=19 // pred_region
          %s208 = smul.u32 %s22, 2
          %s209 = sadd.s32 %s208, %s23
          %p210 = scmp.lt.s32.totalorder %s209, 3
          %s211 = scalar_select %p210, %s209, 3
          %s212 = smul.addr %s211, 8
          %s213 = scalar_lea.vmem %s2, %s212
          %s214 = smul.u32 %s22, 2
          %s215 = sadd.s32 %s214, %s23
        $region28: #{tpu_custom_call.1} parent=19 // pred_fallthru
          _
        // Predicated region
        $region29: #{tpu_custom_call.1} parent=19 // pred_check
          %p216 = pneg %p115
        $region30: #{tpu_custom_call.1} parent=19 // pred_check_branch
          %218 = sbr.rel (%p216) target = $region32
        $region31: #{tpu_custom_call.1} parent=19 // pred_region
          %s219 = smul.u32 %s22, 2
          %s220 = sadd.s32 %s219, %s23
          %p221 = scmp.lt.s32.totalorder %s220, 3
          %s222 = scalar_select %p221, %s220, 3
          %s223 = smul.addr %s222, 8
          %s224 = scalar_lea.vmem %s3, %s223
          %s225 = smul.u32 %s22, 2
          %s226 = sadd.s32 %s225, %s23
        $region32: #{tpu_custom_call.1} parent=19 // pred_fallthru
          _
      $region20: #{tpu_custom_call.1} parent=5 // pred_fallthru
        _
      %p227 = scmp.le.s32.totalorder 1, %s15
      %p228 = scmp.lt.s32.totalorder %s15, 5
      %p229 = pnand %p227, %p228
      %p230 = pneg %p229
      // Predicated region
      $region33: #{tpu_custom_call.1} parent=5 // pred_check
        _
      $region34: #{tpu_custom_call.1} parent=5 // pred_check_branch
        %232 = sbr.rel (%p229) target = $region36
      $region35: #{tpu_custom_call.1} parent=5 // pred_region
        %s233 = ssub.s32 %s15, 1
        %s234 = smul.u32 %s24, 2
        %s235 = sadd.s32 %s234, %s25
        %p236 = scmp.lt.s32.totalorder %s235, 2
        %s237 = scalar_select %p236, %s235, 2
        %p238 = scmp.lt.s32.totalorder %s237, 2
        %s239 = scalar_select %p238, %s237, 2
        %s240 = smul.addr %s239, 8
        %s241 = scalar_lea.vmem %s1, %s240
        %p242 = pneg %p61
        %p243 = pneg %p58
        %s244 = smul.u32 %s24, 2
        %s245 = sadd.s32 %s244, %s25
        %p246 = scmp.lt.s32.totalorder %s245, 3
        %s247 = scalar_select %p246, %s245, 3
        %s248 = smul.addr %s247, 8
        %s249 = scalar_lea.vmem %s2, %s248
        %p250 = pneg %p91
        %p251 = pneg %p88
        %s252 = smul.u32 %s24, 2
        %s253 = sadd.s32 %s252, %s25
        %p254 = scmp.lt.s32.totalorder %s253, 3
        %s255 = scalar_select %p254, %s253, 3
        %s256 = smul.addr %s255, 8
        %s257 = scalar_lea.vmem %s3, %s256
        %p258 = pneg %p121
        %p259 = pneg %p118
        %p260 = pneg %p142
        %p261 = pneg %p139
        %p262 = pneg %p168
        %p263 = pneg %p165
        %s264 = sand.u32 %s155, 1
        %s265 = scalar_lea.sflag [#allocation6], %s264
        %s266 = sand.u32 %s155, 1
        %s267 = smul.addr %s266, 8
        %s268 = scalar_lea.vmem [#allocation5], %s267
        %s269 = smul.u32 %s24, 2
        %s270 = sadd.s32 %s269, %s25
        %p271 = scmp.lt.s32.totalorder %s270, 2
        %s272 = scalar_select %p271, %s270, 2
        %p273 = scmp.lt.s32.totalorder %s272, 2
        %s274 = scalar_select %p273, %s272, 2
        %s275 = smul.addr %s274, 8
        %s276 = scalar_lea.vmem %s1, %s275
        %s277 = smul.u32 %s24, 2
        %s278 = sadd.s32 %s277, %s25
        %p279 = scmp.lt.s32.totalorder %s278, 2
        %s280 = scalar_select %p279, %s278, 2
        %s281 = smul.u32 %s24, 2
        %s282 = sadd.s32 %s281, %s25
        %p283 = scmp.lt.s32.totalorder %s282, 3
        %s284 = scalar_select %p283, %s282, 3
        %s285 = smul.addr %s284, 8
        %s286 = scalar_lea.vmem %s2, %s285
        %s287 = smul.u32 %s24, 2
        %s288 = sadd.s32 %s287, %s25
        %s289 = smul.u32 %s24, 2
        %s290 = sadd.s32 %s289, %s25
        %p291 = scmp.lt.s32.totalorder %s290, 3
        %s292 = scalar_select %p291, %s290, 3
        %s293 = smul.addr %s292, 8
        %s294 = scalar_lea.vmem %s3, %s293
        %s295 = smul.u32 %s24, 2
        %s296 = sadd.s32 %s295, %s25
        %p297 = scmp.eq.s32.totalorder %s25, 0
        // Predicated region
        $region37: #{tpu_custom_call.1} parent=35 // pred_check
          %p298 = pneg %p297
        $region38: #{tpu_custom_call.1} parent=35 // pred_check_branch
          %300 = sbr.rel (%p298) target = $region40
        $region39: #{tpu_custom_call.1} parent=35 // pred_region
          %vm301 = vcmask 7168
          %302 = vst.msk [vmem:[#allocation2] sm:$0xff] %vm301, 0.0
        $region40: #{tpu_custom_call.1} parent=35 // pred_fallthru
          _
        %v303 = vld [vmem:[%s276] sm:$0xff]
        %v304 = vld [vmem:[%s286] sm:$0xff]
        %v305 = vld [vmem:[%s294] sm:$0xff]
        %v306 = vld [vmem:[%s4] sm:$0x1]
        %v307 = vperm.slane %v306, 0
        %308 = vset.pattern.permute.xlu0 0
        %309 = vperm.xlu0 %308, %v304
        %v310 = vpop.permute.xlu0 %309
        %vm311 = vcmp.eq.s32.totalorder %v307, %v310
        %v312 = vsel %vm311, %v303, 0.0
        %vm313 = vcmask 261120
        %v314 = vsel %vm313, %v312, 0.0
        %315 = vadd.xlane.f32.xlu0 %v314
        %v316 = vpop.xlane.xlu0 %315
        %s317 = smul.u32 %s24, 2
        %s318 = sadd.s32 %s317, %s25
        %s319 = smul.u32 %s318, 8
        %v320 = vlaneseq
        %v321 = vshrl.u32 %v320, 7
        %v322 = vstv %s319
        %v323 = vadd.s32 %v322, %v321
        %vm324 = vcmp.lt.s32.totalorder %v323, 18
        %v325 = vsel %vm324, %v316, 0.0
        %v326 = vld [vmem:[#allocation2] sm:$0xff]
        %v327 = vmul.f32 %v325, %v305
        %v328 = vadd.f32 %v326, %v327
        %vm329 = vcmask 7168
        %330 = vst.msk [vmem:[#allocation2] sm:$0xff] %vm329, %v328
        %p331 = scmp.eq.s32.totalorder %s25, 1
        // Predicated region
        $region41: #{tpu_custom_call.1} parent=35 // pred_check
          %p332 = pneg %p331
        $region42: #{tpu_custom_call.1} parent=35 // pred_check_branch
          %334 = sbr.rel (%p332) target = $region44
        $region43: #{tpu_custom_call.1} parent=35 // pred_region
          %v335 = vld [vmem:[#allocation2] sm:$0xff]
          %v336 = vsel %vm329, %v335, 0.0
          %337 = vadd.xlane.f32.xlu0 %v336
          %v338 = vpop.xlane.xlu0 %337
          %v339 = vrot.slane %v338, 4
          %v340 = vadd.f32 %v338, %v339
          %v341 = vrot.slane %v340, 2
          %v342 = vadd.f32 %v340, %v341
          %v343 = vrot.slane %v342, 1
          %v344 = vadd.f32 %v342, %v343
          %s345 = vtos %v344
          %s346 = ssub.f32 0.0, %s345
          %s347 = sld [smem:[#allocation4]]
          %s348 = scvt.s32.f32 %s347
          %v349 = vstv %s348
          %v350 = vrcp.pop %v349
          %v351 = vmul.f32 %v349, %v350
          %v352 = vsub.f32 1.0, %v351
          %v353 = vmul.f32 %v350, %v352
          %v354 = vadd.f32 %v350, %v353
          %vm355 = vweird.f32 %v349
          %vm356 = vweird.f32 %v350
          %vm357 = vmor %vm355, %vm356
          %v358 = vsel %vm357, %v350, %v354
          %v359 = vand.u32 2147483647, %v349
          %vm360 = vcmp.eq.f32.partialorder %v359, 8.507059e+37
          %v361 = vand.u32 %v349, 2147483648
          %v362 = vor.u32 1.1754944e-38, %v361
          %v363 = vsel %vm360, %v362, %v358
          %s364 = vtos %v363
          %s365 = smul.f32 %s346, %s364
          %v366 = vstv %s365
          %367 = vst [vmem:[%s268] sm:$0xff] %v366
        $region44: #{tpu_custom_call.1} parent=35 // pred_fallthru
          _
        %s368 = sand.u32 %s155, 1
        %s369 = scalar_lea.sflag [#allocation6], %s368
        %s370 = sand.u32 %s155, 1
        %s371 = smul.addr %s370, 8
        %s372 = scalar_lea.vmem [#allocation5], %s371
        // Predicated region
        $region45: #{tpu_custom_call.1} parent=35 // pred_check
          %p373 = pneg %p165
        $region46: #{tpu_custom_call.1} parent=35 // pred_check_branch
          %375 = sbr.rel (%p373) target = $region48
        $region47: #{tpu_custom_call.1} parent=35 // pred_region
          %377 = vsyncadd %s369, 0
          %s378 = smul.addr %s24, 8
          %s379 = scalar_lea.hbm %s5, %s378
          %s381 = sshll.u32 %s372, 4
          %s382 = int_to_ptr.vmem [resolvable:$true] %s381
          %s383 = sshll.u32 %s379, 4
          %s384 = int_to_ptr.hbm [resolvable:$true] %s383
          %386 = dma.vmem_to_hbm [thread:$0]  %s382, 128, %s384, %s369
        $region48: #{tpu_custom_call.1} parent=35 // pred_fallthru
          _
      $region36: #{tpu_custom_call.1} parent=5 // pred_fallthru
        _
      %p387 = scmp.le.s32.totalorder 2, %s15
      // Predicated region
      $region49: #{tpu_custom_call.1} parent=5 // pred_check
        %p388 = pneg %p387
      $region50: #{tpu_custom_call.1} parent=5 // pred_check_branch
        %390 = sbr.rel (%p388) target = $region52
      $region51: #{tpu_custom_call.1} parent=5 // pred_region
        %s391 = ssub.s32 %s15, 2
        // Predicated region
        $region53: #{tpu_custom_call.1} parent=51 // pred_check
          %p392 = pneg %p171
        $region54: #{tpu_custom_call.1} parent=51 // pred_check_branch
          %394 = sbr.rel (%p392) target = $region56
        $region55: #{tpu_custom_call.1} parent=51 // pred_region
          %s395 = sand.u32 %s156, 1
          %s396 = scalar_lea.sflag [#allocation6], %s395
          %s397 = sand.u32 %s156, 1
          %s398 = smul.addr %s397, 8
          %s399 = scalar_lea.vmem [#allocation5], %s398
          %401 = dma.done %s396, 128
        $region56: #{tpu_custom_call.1} parent=51 // pred_fallthru
          _
      $region52: #{tpu_custom_call.1} parent=5 // pred_fallthru
        _
    $region6: #{tpu_custom_call.1} parent=1 // loop_footer
      %s19 = sadd.s32 1, %s15
    $region7: #{tpu_custom_call.1} parent=1 // loop_footer_branch
      %14 = sbr.rel target = $region3
    $region8: #{tpu_custom_call.1} parent=1 // loop_exit
      _
    %402 = vsyncpa [#allocation6], 1
    %s403 = scalar_lea.sflag [#allocation6], 1
    %404 = vsyncpa %s403, 1

</llo_original>
